<compile_context>
chip_gen: v7x
topology: tpu7x:2x2x1
jax: 0.10.0
libtpu: 0.0.40
codegen_flags: <defaults>
</compile_context>

<pallas_src>
import functools

import jax
import jax.numpy as jnp
from jax.experimental import pallas as pl
from jax.experimental.pallas import tpu as pltpu

EPS = 1e-5
K_TAG = 3          # PyG TAGConv default number of hops
LANE = 128


# ----------------------------------------------------------------------------- helpers
def _rup(n, m=LANE):
    return ((n + m - 1) // m) * m


def _pad2(a, rows, cols):
    a = jnp.asarray(a)
    return jnp.pad(a, ((0, rows - a.shape[0]), (0, cols - a.shape[1])))


def _pick_tk(n_pad):
    for tk in (512, 256, 128):
        if n_pad % tk == 0:
            return tk
    return n_pad


def _stack_tag_w(w, cin_p, cout_p):
    """[K+1, Cin, Cout] -> [(K+1)*Cin_p, Cout_p] bf16 (fused TAG contraction)."""
    mats = [_pad2(w[k], cin_p, cout_p) for k in range(K_TAG + 1)]
    return jnp.concatenate(mats, axis=0).astype(jnp.bfloat16)


def build_normalized_adjacency(edge_index, num_nodes):
    """gcn_norm (symmetric, no self-loops), densified: A[i, j] over edges j -> i."""
    src = edge_index[0]
    dst = edge_index[1]
    w = jnp.ones(src.shape[0], dtype=jnp.float32)
    deg = jnp.zeros((num_nodes,), jnp.float32).at[dst].add(w)
    dinv = jnp.where(deg > 0, 1.0 / jnp.sqrt(deg), 0.0)
    norm = dinv[src] * w * dinv[dst]
    return jnp.zeros((num_nodes, num_nodes), jnp.float32).at[dst, src].add(norm)


# ----------------------------------------------------------------------------- kernels
def _stage1_kernel(x_ref, scale_ref, shift_ref, w1_ref, b1_ref, xn_ref, h1_ref):
    """xn = BN(x) via fused scale/shift; h1 = relu(xn @ W1 + b1) (bf16 out)."""
    xn = x_ref[...] * scale_ref[...] + shift_ref[...]
    xn_ref[...] = xn
    h = jnp.dot(xn, w1_ref[...], preferred_element_type=jnp.float32) + b1_ref[...]
    h1_ref[...] = jnp.maximum(h, 0.0).astype(jnp.bfloat16)


def _spmm_kernel(a_ref, h_ref, y_ref, acc_ref):
    """Y = A @ H, tiled over (row tiles, contraction tiles), bf16 in / f32 acc."""
    @pl.when(pl.program_id(1) == 0)
    def _():
        acc_ref[...] = jnp.zeros_like(acc_ref)

    acc_ref[...] += jnp.dot(a_ref[...], h_ref[...],
                            preferred_element_type=jnp.float32)

    @pl.when(pl.program_id(1) == pl.num_programs(1) - 1)
    def _():
        y_ref[...] = acc_ref[...].astype(y_ref.dtype)


def _stage2_kernel(h1_ref, p1_ref, p2_ref, p3_ref, tw_ref, tb_ref,
                   w2_ref, b2_ref, h3_ref):
    """relu(TAGConv1 via fused stacked matmul) -> relu(Linear2) (bf16 out)."""
    stack = jnp.concatenate(
        [h1_ref[...], p1_ref[...], p2_ref[...], p3_ref[...]], axis=1)
    t = jnp.dot(stack, tw_ref[...], preferred_element_type=jnp.float32) + tb_ref[...]
    t = jnp.maximum(t, 0.0)
    h = jnp.dot(t, w2_ref[...], preferred_element_type=jnp.float32) + b2_ref[...]
    h3_ref[...] = jnp.maximum(h, 0.0).astype(jnp.bfloat16)


def _stage3_kernel(xn_ref, h3_ref, g1_ref, g2_ref, g3_ref, tw_ref, tb_ref,
                   w3x_ref, w3h_ref, b3_ref, w4_ref, b4_ref, out_ref, *, out_dim):
    """relu(TAGConv2) -> relu(Linear3(cat[xn,h])) -> Linear4 -> masked softmax."""
    stack = jnp.concatenate(
        [h3_ref[...], g1_ref[...], g2_ref[...], g3_ref[...]], axis=1)
    h4 = jnp.dot(stack, tw_ref[...], preferred_element_type=jnp.float32) + tb_ref[...]
    h4 = jnp.maximum(h4, 0.0)

    a = (jnp.dot(xn_ref[...], w3x_ref[...], preferred_element_type=jnp.float32)
         + jnp.dot(h4, w3h_ref[...], preferred_element_type=jnp.float32)
         + b3_ref[...])
    a = jnp.maximum(a, 0.0)

    logits = jnp.dot(a, w4_ref[...], preferred_element_type=jnp.float32) + b4_ref[...]
    lane = jax.lax.broadcasted_iota(jnp.int32, logits.shape, 1)
    logits = jnp.where(lane < out_dim, logits, -1e30)   # mask padded classes

    m = jnp.max(logits, axis=-1, keepdims=True)
    e = jnp.exp(logits - m)
    denom = jnp.sum(e, axis=-1, keepdims=True)
    out_ref[...] = e * pl.reciprocal(denom, approx=True)


# ----------------------------------------------------------------------------- wrapper
def _spmm(a_bf16, h_bf16, tm, tk):
    n_pad = a_bf16.shape[0]
    c = h_bf16.shape[1]
    flops = 2 * n_pad * n_pad * c
    bytes_acc = n_pad * n_pad * 2 + 2 * n_pad * c * 2
    return pl.pallas_call(
        _spmm_kernel,
        out_shape=jax.ShapeDtypeStruct((n_pad, c), jnp.bfloat16),
        grid=(n_pad // tm, n_pad // tk),
        in_specs=[pl.BlockSpec((tm, tk), lambda i, k: (i, k)),
                  pl.BlockSpec((tk, c), lambda i, k: (k, 0))],
        out_specs=pl.BlockSpec((tm, c), lambda i, k: (i, 0)),
        scratch_shapes=[pltpu.VMEM((tm, c), jnp.float32)],
        compiler_params=pltpu.CompilerParams(
            dimension_semantics=("parallel", "arbitrary")),
        cost_estimate=pl.CostEstimate(flops=flops, transcendentals=0,
                                      bytes_accessed=bytes_acc),
    )(a_bf16, h_bf16)


def node_glam_forward(x, edge_index, params, output_dim):
    n, f = x.shape
    h0 = params["w1"].shape[1]
    h1 = params["tag1_w"].shape[2]
    h2 = params["w2"].shape[1]
    h3 = params["tag2_w"].shape[2]
    h4 = params["w3"].shape[1]

    n_pad = _rup(n)
    fp, c1p, c2p, c3p, c4p, c5p = (_rup(d) for d in (f, h0, h1, h2, h3, h4))
    outp = _rup(output_dim)
    tm = LANE
    tk = _pick_tk(n_pad)
    n_tiles = n_pad // tm

    # --- BatchNorm (training-mode, biased var) stats on real rows, fused scale/shift.
    mean = jnp.mean(x, axis=0)
    var = jnp.mean((x - mean[None, :]) ** 2, axis=0)
    scale = params["bn_gamma"].reshape(-1) * jax.lax.rsqrt(var + EPS)
    shift = params["bn_beta"].reshape(-1) - mean * scale

    # --- Dense normalized adjacency, padded to N_pad and cast to bf16 for the MXU.
    # TODO(synk): replace the dense densified A with a sparse SpMM
    # (PrefetchScalarGridSpec + neighbor-list DMA gather) for avg_degree << N graphs.
    a_bf16 = _pad2(build_normalized_adjacency(edge_index, n),
                   n_pad, n_pad).astype(jnp.bfloat16)

    # --- Pad params / inputs to lane-dense shapes (all done in the wrapper).
    x_pad = _pad2(x, n_pad, fp)
    scale_pad = _pad2(scale[None, :], 1, fp)
    shift_pad = _pad2(shift[None, :], 1, fp)
    w1_pad = _pad2(params["w1"], fp, c1p)
    b1_pad = _pad2(params["b1"], 1, c1p)
    tag1_w_stk = _stack_tag_w(params["tag1_w"], c1p, c2p)
    tag1_b_pad = _pad2(params["tag1_b"], 1, c2p)
    w2_pad = _pad2(params["w2"], c2p, c3p)
    b2_pad = _pad2(params["b2"], 1, c3p)
    tag2_w_stk = _stack_tag_w(params["tag2_w"], c3p, c4p)
    tag2_b_pad = _pad2(params["tag2_b"], 1, c4p)
    w3x_pad = _pad2(params["w3"][:f, :], fp, c5p)
    w3h_pad = _pad2(params["w3"][f:, :], c4p, c5p)
    b3_pad = _pad2(params["b3"], 1, c5p)
    w4_pad = _pad2(params["w4"], c5p, outp)
    b4_pad = _pad2(params["b4"], 1, outp)

    par1 = pltpu.CompilerParams(dimension_semantics=("parallel",))

    # --- Stage 1: BN + Linear1 + relu (row-tiled, trivially parallel).
    xn, h1 = pl.pallas_call(
        _stage1_kernel,
        out_shape=(jax.ShapeDtypeStruct((n_pad, fp), jnp.float32),
                   jax.ShapeDtypeStruct((n_pad, c1p), jnp.bfloat16)),
        grid=(n_tiles,),
        in_specs=[pl.BlockSpec((tm, fp), lambda i: (i, 0)),
                  pl.BlockSpec((1, fp), lambda i: (0, 0)),
                  pl.BlockSpec((1, fp), lambda i: (0, 0)),
                  pl.BlockSpec((fp, c1p), lambda i: (0, 0)),
                  pl.BlockSpec((1, c1p), lambda i: (0, 0))],
        out_specs=(pl.BlockSpec((tm, fp), lambda i: (i, 0)),
                   pl.BlockSpec((tm, c1p), lambda i: (i, 0))),
        compiler_params=par1,
    )(x_pad, scale_pad, shift_pad, w1_pad, b1_pad)

    # --- TAGConv1 hops: A h, A^2 h, A^3 h via tiled bf16 SpMM.
    hop1 = _spmm(a_bf16, h1, tm, tk)
    hop2 = _spmm(a_bf16, hop1, tm, tk)
    hop3 = _spmm(a_bf16, hop2, tm, tk)

    # --- Stage 2: fused TAGConv1 mix + relu + Linear2 + relu.
    h3_act = pl.pallas_call(
        _stage2_kernel,
        out_shape=jax.ShapeDtypeStruct((n_pad, c3p), jnp.bfloat16),
        grid=(n_tiles,),
        in_specs=[pl.BlockSpec((tm, c1p), lambda i: (i, 0)),
                  pl.BlockSpec((tm, c1p), lambda i: (i, 0)),
                  pl.BlockSpec((tm, c1p), lambda i: (i, 0)),
                  pl.BlockSpec((tm, c1p), lambda i: (i, 0)),
                  pl.BlockSpec(((K_TAG + 1) * c1p, c2p), lambda i: (0, 0)),
                  pl.BlockSpec((1, c2p), lambda i: (0, 0)),
                  pl.BlockSpec((c2p, c3p), lambda i: (0, 0)),
                  pl.BlockSpec((1, c3p), lambda i: (0, 0))],
        out_specs=pl.BlockSpec((tm, c3p), lambda i: (i, 0)),
        compiler_params=par1,
    )(h1, hop1, hop2, hop3, tag1_w_stk, tag1_b_pad, w2_pad, b2_pad)

    # --- TAGConv2 hops.
    g1 = _spmm(a_bf16, h3_act, tm, tk)
    g2 = _spmm(a_bf16, g1, tm, tk)
    g3 = _spmm(a_bf16, g2, tm, tk)

    # --- Stage 3: fused TAGConv2 mix + relu, split-matmul Linear3(cat) + relu,
    #              Linear4, masked softmax (lane-dense 128-wide output).
    out_pad = pl.pallas_call(
        functools.partial(_stage3_kernel, out_dim=output_dim),
        out_shape=jax.ShapeDtypeStruct((n_pad, outp), jnp.float32),
        grid=(n_tiles,),
        in_specs=[pl.BlockSpec((tm, fp), lambda i: (i, 0)),
                  pl.BlockSpec((tm, c3p), lambda i: (i, 0)),
                  pl.BlockSpec((tm, c3p), lambda i: (i, 0)),
                  pl.BlockSpec((tm, c3p), lambda i: (i, 0)),
                  pl.BlockSpec((tm, c3p), lambda i: (i, 0)),
                  pl.BlockSpec(((K_TAG + 1) * c3p, c4p), lambda i: (0, 0)),
                  pl.BlockSpec((1, c4p), lambda i: (0, 0)),
                  pl.BlockSpec((fp, c5p), lambda i: (0, 0)),
                  pl.BlockSpec((c4p, c5p), lambda i: (0, 0)),
                  pl.BlockSpec((1, c5p), lambda i: (0, 0)),
                  pl.BlockSpec((c5p, outp), lambda i: (0, 0)),
                  pl.BlockSpec((1, outp), lambda i: (0, 0))],
        out_specs=pl.BlockSpec((tm, outp), lambda i: (i, 0)),
        compiler_params=par1,
    )(xn, h3_act, g1, g2, g3, tag2_w_stk, tag2_b_pad,
      w3x_pad, w3h_pad, b3_pad, w4_pad, b4_pad)

    return out_pad[:n, :output_dim]


# ----------------------------------------------------------------------------- reference
def node_glam_reference(x, edge_index, params):
    a = build_normalized_adjacency(edge_index, x.shape[0])
    mean = jnp.mean(x, axis=0, keepdims=True)
    var = jnp.mean((x - mean) ** 2, axis=0, keepdims=True)
    xn = (x - mean) * jax.lax.rsqrt(var + EPS) * params["bn_gamma"] + params["bn_beta"]

    def tag(h, w, b):
        out = h @ w[0]
        hk = h
        for k in range(1, K_TAG + 1):
            hk = a @ hk
            out = out + hk @ w[k]
        return out + b

    h = jnp.maximum(xn @ params["w1"] + params["b1"], 0.0)
    h = jnp.maximum(tag(h, params["tag1_w"], params["tag1_b"]), 0.0)
    h = jnp.maximum(h @ params["w2"] + params["b2"], 0.0)
    h = jnp.maximum(tag(h, params["tag2_w"], params["tag2_b"]), 0.0)
    aa = jnp.concatenate([xn, h], axis=1)
    aa = jnp.maximum(aa @ params["w3"] + params["b3"], 0.0)
    return jax.nn.softmax(aa @ params["w4"] + params["b4"], axis=-1)


def init_params(key, input_dim, h, output_dim):
    ks = jax.random.split(key, 12)
    s = 0.1
    return {
        "bn_gamma": jnp.ones((1, input_dim), jnp.float32),
        "bn_beta": jnp.zeros((1, input_dim), jnp.float32),
        "w1": s * jax.random.normal(ks[0], (input_dim, h[0]), jnp.float32),
        "b1": s * jax.random.normal(ks[1], (1, h[0]), jnp.float32),
        "tag1_w": s * jax.random.normal(ks[2], (K_TAG + 1, h[0], h[1]), jnp.float32),
        "tag1_b": s * jax.random.normal(ks[3], (1, h[1]), jnp.float32),
        "w2": s * jax.random.normal(ks[4], (h[1], h[2]), jnp.float32),
        "b2": s * jax.random.normal(ks[5], (1, h[2]), jnp.float32),
        "tag2_w": s * jax.random.normal(ks[6], (K_TAG + 1, h[2], h[3]), jnp.float32),
        "tag2_b": s * jax.random.normal(ks[7], (1, h[3]), jnp.float32),
        "w3": s * jax.random.normal(ks[8], (h[3] + input_dim, h[4]), jnp.float32),
        "b3": s * jax.random.normal(ks[9], (1, h[4]), jnp.float32),
        "w4": s * jax.random.normal(ks[10], (h[4], output_dim), jnp.float32),
        "b4": s * jax.random.normal(ks[11], (1, output_dim), jnp.float32),
    }


if __name__ == "__main__":
    # Small synthetic problem: 16 nodes, input_=8, h=[16,16,16,16,32], output_=4.
    N = 16
    INPUT = 8
    H = [16, 16, 16, 16, 32]
    OUTPUT = 4

    key = jax.random.PRNGKey(0)
    k_x, k_p = jax.random.split(key)
    x = jax.random.normal(k_x, (N, INPUT), jnp.float32)

    # Deterministic ring graph (both directions) as edge_index [2, E].
    idx = jnp.arange(N, dtype=jnp.int32)
    src = jnp.concatenate([idx, (idx + 1) % N])
    dst = jnp.concatenate([(idx + 1) % N, idx])
    edge_index = jnp.stack([src, dst], axis=0)     # [2, 32]

    params = init_params(k_p, INPUT, H, OUTPUT)

    out = node_glam_forward(x, edge_index, params, OUTPUT)
    out = jax.block_until_ready(out)
    ref = node_glam_reference(x, edge_index, params)

    assert out.shape == (N, OUTPUT)
    assert bool(jnp.all(jnp.isfinite(out)))
    assert bool(jnp.allclose(jnp.sum(out, axis=-1), 1.0, atol=5e-3))
    assert bool(jnp.allclose(out, ref, atol=2e-2))
    print("KERNEL_OK")
</pallas_src>

<mosaic_0001>
module attributes {stable_mosaic.version = 11 : i64} {
  func.func @_stage1_kernel(%arg0: i32, %arg1: memref<128x128xf32, #tpu.memory_space<vmem>>, %arg2: memref<1x128xf32, #tpu.memory_space<vmem>>, %arg3: memref<1x128xf32, #tpu.memory_space<vmem>>, %arg4: memref<128x128xf32, #tpu.memory_space<vmem>>, %arg5: memref<1x128xf32, #tpu.memory_space<vmem>>, %arg6: memref<128x128xf32, #tpu.memory_space<vmem>>, %arg7: memref<128x128xbf16, #tpu.memory_space<vmem>>) attributes {dimension_semantics = [#tpu.dimension_semantics<parallel>], iteration_bounds = array<i64: 1>, scalar_prefetch = 0 : i64, scratch_operands = 0 : i64, tpu.core_type = #tpu.core_type<tc>, window_params = [{transform_indices = @transform_0, window_bounds = array<i64: 128, 128>}, {pipeline_mode = #tpu.pipeline_mode<synchronous>, transform_indices = @transform_1, window_bounds = array<i64: 1, 128>}, {pipeline_mode = #tpu.pipeline_mode<synchronous>, transform_indices = @transform_2, window_bounds = array<i64: 1, 128>}, {pipeline_mode = #tpu.pipeline_mode<synchronous>, transform_indices = @transform_3, window_bounds = array<i64: 128, 128>}, {pipeline_mode = #tpu.pipeline_mode<synchronous>, transform_indices = @transform_4, window_bounds = array<i64: 1, 128>}, {transform_indices = @transform_5, window_bounds = array<i64: 128, 128>}, {transform_indices = @transform_6, window_bounds = array<i64: 128, 128>}]} {
    %c0 = arith.constant 0 : index
    %c0_0 = arith.constant 0 : index
    %0 = vector.load %arg1[%c0, %c0_0] : memref<128x128xf32, #tpu.memory_space<vmem>>, vector<128x128xf32>
    %c0_1 = arith.constant 0 : index
    %c0_2 = arith.constant 0 : index
    %1 = vector.load %arg2[%c0_1, %c0_2] : memref<1x128xf32, #tpu.memory_space<vmem>>, vector<1x128xf32>
    %2 = vector.broadcast %1 : vector<1x128xf32> to vector<128x128xf32>
    %3 = arith.mulf %0, %2 : vector<128x128xf32>
    %c0_3 = arith.constant 0 : index
    %c0_4 = arith.constant 0 : index
    %4 = vector.load %arg3[%c0_3, %c0_4] : memref<1x128xf32, #tpu.memory_space<vmem>>, vector<1x128xf32>
    %5 = vector.broadcast %4 : vector<1x128xf32> to vector<128x128xf32>
    %6 = arith.addf %3, %5 : vector<128x128xf32>
    %c0_5 = arith.constant 0 : index
    %c0_6 = arith.constant 0 : index
    %7 = vector.load %arg6[%c0_5, %c0_6] : memref<128x128xf32, #tpu.memory_space<vmem>>, vector<128x128xf32>
    tpu.vector_store %arg6[%c0_5, %c0_6], %6 {strides = array<i32>} : memref<128x128xf32, #tpu.memory_space<vmem>>, vector<128x128xf32>,
    %c0_7 = arith.constant 0 : index
    %c0_8 = arith.constant 0 : index
    %8 = vector.load %arg4[%c0_7, %c0_8] : memref<128x128xf32, #tpu.memory_space<vmem>>, vector<128x128xf32>
    %cst = arith.constant dense<0.000000e+00> : vector<128x128xf32>
    %9 = tpu.matmul %6, %8, %cst {dimension_numbers = #tpu.dot_dimension_numbers<[1], [0], [0], [1], [0, 0, 1, 1], [], []>} : vector<128x128xf32>, vector<128x128xf32>, vector<128x128xf32> -> vector<128x128xf32>
    %c0_9 = arith.constant 0 : index
    %c0_10 = arith.constant 0 : index
    %10 = vector.load %arg5[%c0_9, %c0_10] : memref<1x128xf32, #tpu.memory_space<vmem>>, vector<1x128xf32>
    %11 = vector.broadcast %10 : vector<1x128xf32> to vector<128x128xf32>
    %12 = arith.addf %9, %11 : vector<128x128xf32>
    %cst_11 = arith.constant 0.000000e+00 : f32
    %13 = vector.broadcast %cst_11 : f32 to vector<128x128xf32>
    %14 = arith.maximumf %12, %13 : vector<128x128xf32>
    %15 = arith.truncf %14 : vector<128x128xf32> to vector<128x128xbf16>
    %c0_12 = arith.constant 0 : index
    %c0_13 = arith.constant 0 : index
    %16 = vector.load %arg7[%c0_12, %c0_13] : memref<128x128xbf16, #tpu.memory_space<vmem>>, vector<128x128xbf16>
    tpu.vector_store %arg7[%c0_12, %c0_13], %15 {strides = array<i32>} : memref<128x128xbf16, #tpu.memory_space<vmem>>, vector<128x128xbf16>,
    return
  }
  func.func @transform_0(%arg0: i32) -> (i32, i32) {
    %c0_i32 = arith.constant 0 : i32
    %c0_i32_0 = arith.constant 0 : i32
    return %arg0, %c0_i32 : i32, i32
  }
  func.func @transform_1(%arg0: i32) -> (i32, i32) {
    %c0_i32 = arith.constant 0 : i32
    %c0_i32_0 = arith.constant 0 : i32
    %c0_i32_1 = arith.constant 0 : i32
    return %c0_i32, %c0_i32_0 : i32, i32
  }
  func.func @transform_2(%arg0: i32) -> (i32, i32) {
    %c0_i32 = arith.constant 0 : i32
    %c0_i32_0 = arith.constant 0 : i32
    %c0_i32_1 = arith.constant 0 : i32
    return %c0_i32, %c0_i32_0 : i32, i32
  }
  func.func @transform_3(%arg0: i32) -> (i32, i32) {
    %c0_i32 = arith.constant 0 : i32
    %c0_i32_0 = arith.constant 0 : i32
    %c0_i32_1 = arith.constant 0 : i32
    return %c0_i32, %c0_i32_0 : i32, i32
  }
  func.func @transform_4(%arg0: i32) -> (i32, i32) {
    %c0_i32 = arith.constant 0 : i32
    %c0_i32_0 = arith.constant 0 : i32
    %c0_i32_1 = arith.constant 0 : i32
    return %c0_i32, %c0_i32_0 : i32, i32
  }
  func.func @transform_5(%arg0: i32) -> (i32, i32) {
    %c0_i32 = arith.constant 0 : i32
    %c0_i32_0 = arith.constant 0 : i32
    return %arg0, %c0_i32 : i32, i32
  }
  func.func @transform_6(%arg0: i32) -> (i32, i32) {
    %c0_i32 = arith.constant 0 : i32
    %c0_i32_0 = arith.constant 0 : i32
    return %arg0, %c0_i32 : i32, i32
  }
}

</mosaic_0001>

<llo_original>
// kernel: tpu_custom_call.1
$region0: #{tpu_custom_call.1}
  #allocation0 [shape = 'u32[]', space=smem, size = 0x4, offset = 0x4, fixed_abs, tag = 'smem constant byte address 0x4 - core index']
  #allocation1 [shape = 'u32[144,128]{1,0:T(1,128)}', space=vmem, size = 0x12000, scoped, tag = 'internal scratch']
  %s0 = inlined_call_operand.hbm [shape: f32[128,128], index: 0, kind: input, shape index: {}]
  %s1 = inlined_call_operand.vmem [shape: f32[1,128], index: 1, kind: input, shape index: {}]
  %s2 = inlined_call_operand.vmem [shape: f32[1,128], index: 2, kind: input, shape index: {}]
  %s3 = inlined_call_operand.hbm [shape: f32[128,128], index: 3, kind: input, shape index: {}]
  %s4 = inlined_call_operand.vmem [shape: f32[1,128], index: 4, kind: input, shape index: {}]
  %s5 = inlined_call_operand.hbm [shape: f32[128,128], index: 5, kind: output, shape index: {0}]
  %s6 = inlined_call_operand.hbm [shape: bf16[128,128], index: 6, kind: output, shape index: {1}]
  %7 = xla_tuple %s5, %s6
  %s8 = sld [smem:[#allocation0]]
  $region46: #{tpu_custom_call.1} parent=0
    _
  %s10 = ssub.s32 1, %s8
  %s11 = scalar_select 0, %s10, %s8
  $region1: #{tpu_custom_call.1} parent=0
    #allocation2 [shape = 'u8[65536]{0}', space=vmem, size = 0x10000, scoped, tag = 'input window, operand 0, single buffered']
    #allocation3 [shape = 's32[1]{0}', space=sflag, size = 0x4, scoped, tag = 'scoped memory for tpu_custom_call.1']
    #allocation4 [shape = 's32[1]{0}', space=sflag, size = 0x4, scoped, tag = 'scoped memory for tpu_custom_call.1']
    #allocation5 [shape = 'u8[65536]{0}', space=vmem, size = 0x10000, scoped, tag = 'input window, operand 3, single buffered']
    #allocation6 [shape = 's32[1]{0}', space=sflag, size = 0x4, scoped, tag = 'scoped memory for tpu_custom_call.1']
    #allocation7 [shape = 'u8[65536]{0}', space=vmem, size = 0x10000, scoped, tag = 'output window, operand 0, single buffered']
    #allocation8 [shape = 'u8[32768]{0}', space=vmem, size = 0x8000, scoped, tag = 'output window, operand 1, single buffered']
    #allocation9 [shape = 's32[1]{0}', space=sflag, size = 0x4, scoped, tag = 'scoped memory for tpu_custom_call.1']
    %12 = vsyncpa [#allocation3], 0
    %13 = vsyncpa [#allocation6], 0
    %14 = vsyncpa [#allocation4], 0
    %15 = vsyncpa [#allocation9], 0
    // Predicated region
    $region2: #{tpu_custom_call.1} parent=1 // pred_check
      _
    $region3: #{tpu_custom_call.1} parent=1 // pred_check_branch
      %17 = sbr.rel (0) target = $region5
    $region4: #{tpu_custom_call.1} parent=1 // pred_region
      %s19 = ssub.s32 2048, 2048
      %20 = vsyncadd [#allocation3], %s19
      %s21 = sshll.u32 [#allocation2], 4
      %s22 = int_to_ptr.vmem [resolvable:$true] %s21
      %27 = dma.hbm_to_vmem [thread:$0]  %s0, 2048, %s22, [#allocation3], 128, 128, 8
    $region5: #{tpu_custom_call.1} parent=1 // pred_fallthru
      _
    // Predicated region
    $region6: #{tpu_custom_call.1} parent=1 // pred_check
      _
    $region7: #{tpu_custom_call.1} parent=1 // pred_check_branch
      %29 = sbr.rel (0) target = $region9
    $region8: #{tpu_custom_call.1} parent=1 // pred_region
      _
    $region9: #{tpu_custom_call.1} parent=1 // pred_fallthru
      _
    // Predicated region
    $region10: #{tpu_custom_call.1} parent=1 // pred_check
      _
    $region11: #{tpu_custom_call.1} parent=1 // pred_check_branch
      %31 = sbr.rel (0) target = $region13
    $region12: #{tpu_custom_call.1} parent=1 // pred_region
      _
    $region13: #{tpu_custom_call.1} parent=1 // pred_fallthru
      _
    // Predicated region
    $region14: #{tpu_custom_call.1} parent=1 // pred_check
      _
    $region15: #{tpu_custom_call.1} parent=1 // pred_check_branch
      %33 = sbr.rel (0) target = $region17
    $region16: #{tpu_custom_call.1} parent=1 // pred_region
      %s35 = ssub.s32 2048, 2048
      %36 = vsyncadd [#allocation6], %s35
      %s37 = sshll.u32 [#allocation5], 4
      %s38 = int_to_ptr.vmem [resolvable:$true] %s37
      %43 = dma.hbm_to_vmem [thread:$0]  %s3, 2048, %s38, [#allocation6], 128, 128, 8
    $region17: #{tpu_custom_call.1} parent=1 // pred_fallthru
      _
    // Predicated region
    $region18: #{tpu_custom_call.1} parent=1 // pred_check
      _
    $region19: #{tpu_custom_call.1} parent=1 // pred_check_branch
      %45 = sbr.rel (0) target = $region21
    $region20: #{tpu_custom_call.1} parent=1 // pred_region
      _
    $region21: #{tpu_custom_call.1} parent=1 // pred_fallthru
      _
    // Predicated region
    $region22: #{tpu_custom_call.1} parent=1 // pred_check
      _
    $region23: #{tpu_custom_call.1} parent=1 // pred_check_branch
      %47 = sbr.rel (0) target = $region25
    $region24: #{tpu_custom_call.1} parent=1 // pred_region
      %48 = dma.done [#allocation3], 2048
    $region25: #{tpu_custom_call.1} parent=1 // pred_fallthru
      _
    // Predicated region
    $region26: #{tpu_custom_call.1} parent=1 // pred_check
      _
    $region27: #{tpu_custom_call.1} parent=1 // pred_check_branch
      %50 = sbr.rel (0) target = $region29
    $region28: #{tpu_custom_call.1} parent=1 // pred_region
      %51 = dma.done [#allocation6], 2048
    $region29: #{tpu_custom_call.1} parent=1 // pred_fallthru
      _
    %v52 = vld [vmem:[#allocation2] sm:$0xff]
    %v53 = vld [vmem:[#allocation2 + $0x8] sm:$0xff]
    %v54 = vld [vmem:[#allocation2 + $0x10] sm:$0xff]
    %v55 = vld [vmem:[#allocation2 + $0x18] sm:$0xff]
    %v56 = vld [vmem:[#allocation2 + $0x20] sm:$0xff]
    %v57 = vld [vmem:[#allocation2 + $0x28] sm:$0xff]
    %v58 = vld [vmem:[#allocation2 + $0x30] sm:$0xff]
    %v59 = vld [vmem:[#allocation2 + $0x38] sm:$0xff]
    %v60 = vld [vmem:[#allocation2 + $0x40] sm:$0xff]
    %v61 = vld [vmem:[#allocation2 + $0x48] sm:$0xff]
    %v62 = vld [vmem:[#allocation2 + $0x50] sm:$0xff]
    %v63 = vld [vmem:[#allocation2 + $0x58] sm:$0xff]
    %v64 = vld [vmem:[#allocation2 + $0x60] sm:$0xff]
    %v65 = vld [vmem:[#allocation2 + $0x68] sm:$0xff]
    %v66 = vld [vmem:[#allocation2 + $0x70] sm:$0xff]
    %v67 = vld [vmem:[#allocation2 + $0x78] sm:$0xff]
    %v68 = vld [vmem:[%s1] sm:$0x1]
    %v70 = vlaneseq
    %v71 = vshrl.u32 %v70, 7
    %v72 = vsub.s32 0, %v71
    %v73 = vrot.slane %v68, %v72
    %v75 = vmul.f32 %v52, %v73
    %v76 = vmul.f32 %v53, %v73
    %v77 = vmul.f32 %v54, %v73
    %v78 = vmul.f32 %v55, %v73
    %v79 = vmul.f32 %v56, %v73
    %v80 = vmul.f32 %v57, %v73
    %v81 = vmul.f32 %v58, %v73
    %v82 = vmul.f32 %v59, %v73
    %v83 = vmul.f32 %v60, %v73
    %v84 = vmul.f32 %v61, %v73
    %v85 = vmul.f32 %v62, %v73
    %v86 = vmul.f32 %v63, %v73
    %v87 = vmul.f32 %v64, %v73
    %v88 = vmul.f32 %v65, %v73
    %v89 = vmul.f32 %v66, %v73
    %v90 = vmul.f32 %v67, %v73
    %v91 = vld [vmem:[%s2] sm:$0x1]
    %v93 = vlaneseq
    %v94 = vshrl.u32 %v93, 7
    %v95 = vsub.s32 0, %v94
    %v96 = vrot.slane %v91, %v95
    %v98 = vadd.f32 %v75, %v96
    %v99 = vadd.f32 %v76, %v96
    %v100 = vadd.f32 %v77, %v96
    %v101 = vadd.f32 %v78, %v96
    %v102 = vadd.f32 %v79, %v96
    %v103 = vadd.f32 %v80, %v96
    %v104 = vadd.f32 %v81, %v96
    %v105 = vadd.f32 %v82, %v96
    %v106 = vadd.f32 %v83, %v96
    %v107 = vadd.f32 %v84, %v96
    %v108 = vadd.f32 %v85, %v96
    %v109 = vadd.f32 %v86, %v96
    %v110 = vadd.f32 %v87, %v96
    %v111 = vadd.f32 %v88, %v96
    %v112 = vadd.f32 %v89, %v96
    %v113 = vadd.f32 %v90, %v96
    %114 = vst [vmem:[#allocation7] sm:$0xff] %v98
    %115 = vst [vmem:[#allocation7 + $0x8] sm:$0xff] %v99
    %116 = vst [vmem:[#allocation7 + $0x10] sm:$0xff] %v100
    %117 = vst [vmem:[#allocation7 + $0x18] sm:$0xff] %v101
    %118 = vst [vmem:[#allocation7 + $0x20] sm:$0xff] %v102
    %119 = vst [vmem:[#allocation7 + $0x28] sm:$0xff] %v103
    %120 = vst [vmem:[#allocation7 + $0x30] sm:$0xff] %v104
    %121 = vst [vmem:[#allocation7 + $0x38] sm:$0xff] %v105
    %122 = vst [vmem:[#allocation7 + $0x40] sm:$0xff] %v106
    %123 = vst [vmem:[#allocation7 + $0x48] sm:$0xff] %v107
    %124 = vst [vmem:[#allocation7 + $0x50] sm:$0xff] %v108
    %125 = vst [vmem:[#allocation7 + $0x58] sm:$0xff] %v109
    %126 = vst [vmem:[#allocation7 + $0x60] sm:$0xff] %v110
    %127 = vst [vmem:[#allocation7 + $0x68] sm:$0xff] %v111
    %128 = vst [vmem:[#allocation7 + $0x70] sm:$0xff] %v112
    %129 = vst [vmem:[#allocation7 + $0x78] sm:$0xff] %v113
    %v130 = vld [vmem:[#allocation5] sm:$0xff]
    %v131 = vld [vmem:[#allocation5 + $0x8] sm:$0xff]
    %v132 = vld [vmem:[#allocation5 + $0x10] sm:$0xff]
    %v133 = vld [vmem:[#allocation5 + $0x18] sm:$0xff]
    %v134 = vld [vmem:[#allocation5 + $0x20] sm:$0xff]
    %v135 = vld [vmem:[#allocation5 + $0x28] sm:$0xff]
    %v136 = vld [vmem:[#allocation5 + $0x30] sm:$0xff]
    %v137 = vld [vmem:[#allocation5 + $0x38] sm:$0xff]
    %v138 = vld [vmem:[#allocation5 + $0x40] sm:$0xff]
    %v139 = vld [vmem:[#allocation5 + $0x48] sm:$0xff]
    %v140 = vld [vmem:[#allocation5 + $0x50] sm:$0xff]
    %v141 = vld [vmem:[#allocation5 + $0x58] sm:$0xff]
    %v142 = vld [vmem:[#allocation5 + $0x60] sm:$0xff]
    %v143 = vld [vmem:[#allocation5 + $0x68] sm:$0xff]
    %v144 = vld [vmem:[#allocation5 + $0x70] sm:$0xff]
    %v145 = vld [vmem:[#allocation5 + $0x78] sm:$0xff]
    %v146 = vld [vmem:[%s4] sm:$0x1]
    %v148 = vlaneseq
    %v149 = vshrl.u32 %v148, 7
    %v150 = vsub.s32 0, %v149
    %v151 = vrot.slane %v146, %v150
    %153 = vmatprep.subr.mxu0 0.0
    %154 = vmatpush1.msra.mxu0 %v130
    %155 = vmatprep.subr.mxu0 0.0
    %156 = vmatpush1.msra.mxu0 %v131
    %157 = vmatprep.subr.mxu0 0.0
    %158 = vmatpush1.msra.mxu0 %v132
    %159 = vmatprep.subr.mxu0 0.0
    %160 = vmatpush1.msra.mxu0 %v133
    %161 = vmatprep.subr.mxu0 0.0
    %162 = vmatpush1.msra.mxu0 %v134
    %163 = vmatprep.subr.mxu0 0.0
    %164 = vmatpush1.msra.mxu0 %v135
    %165 = vmatprep.subr.mxu0 0.0
    %166 = vmatpush1.msra.mxu0 %v136
    %167 = vmatprep.subr.mxu0 0.0
    %168 = vmatpush1.msra.mxu0 %v137
    %169 = vmatprep.subr.mxu0 0.0
    %170 = vmatpush1.msra.mxu0 %v138
    %171 = vmatprep.subr.mxu0 0.0
    %172 = vmatpush1.msra.mxu0 %v139
    %173 = vmatprep.subr.mxu0 0.0
    %174 = vmatpush1.msra.mxu0 %v140
    %175 = vmatprep.subr.mxu0 0.0
    %176 = vmatpush1.msra.mxu0 %v141
    %177 = vmatprep.subr.mxu0 0.0
    %178 = vmatpush1.msra.mxu0 %v142
    %179 = vmatprep.subr.mxu0 0.0
    %180 = vmatpush1.msra.mxu0 %v143
    %181 = vmatprep.subr.mxu0 0.0
    %182 = vmatpush1.msra.mxu0 %v144
    %183 = vmatprep.subr.mxu0 0.0
    %184 = vmatpush1.msra.mxu0 %v145
    %185 = vmatprep.subr.mxu0 0.0
    %186 = vmatpush1.msra.mxu0 0.0
    %187 = vmatprep.subr.mxu0 0.0
    %188 = vmatpush1.msra.mxu0 0.0
    %189 = vmatprep.subr.mxu0 0.0
    %190 = vmatpush1.msra.mxu0 0.0
    %191 = vmatprep.subr.mxu0 0.0
    %192 = vmatpush1.msra.mxu0 0.0
    %193 = vmatprep.subr.mxu0 0.0
    %194 = vmatpush1.msra.mxu0 0.0
    %195 = vmatprep.subr.mxu0 0.0
    %196 = vmatpush1.msra.mxu0 0.0
    %197 = vmatprep.subr.mxu0 0.0
    %198 = vmatpush1.msra.mxu0 0.0
    %199 = vmatprep.subr.mxu0 0.0
    %200 = vmatpush1.msra.mxu0 0.0
    %201 = vmatprep.subr.mxu0 0.0
    %202 = vmatpush1.msra.mxu0 0.0
    %203 = vmatprep.subr.mxu0 0.0
    %204 = vmatpush1.msra.mxu0 0.0
    %205 = vmatprep.subr.mxu0 0.0
    %206 = vmatpush1.msra.mxu0 0.0
    %207 = vmatprep.subr.mxu0 0.0
    %208 = vmatpush1.msra.mxu0 0.0
    %209 = vmatprep.subr.mxu0 0.0
    %210 = vmatpush1.msra.mxu0 0.0
    %211 = vmatprep.subr.mxu0 0.0
    %212 = vmatpush1.msra.mxu0 0.0
    %213 = vmatprep.subr.mxu0 0.0
    %214 = vmatpush1.msra.mxu0 0.0
    %215 = vmatprep.subr.mxu0 0.0
    %216 = vmatpush1.msra.mxu0 0.0
    %217 = vmatprep.mubr.f32.mxu0 0.0
    %218 = vmatmul.mubr.f32.gmra.mrb[0].mxu0 %v98
    %v219 = vpop.f32.mrb[0].mxu0
    %v220 = vadd.f32 %v151, %v219
    %v221 = vpop.f32.mrb[0].mxu0
    %222 = vmatprep.mubr.f32.mxu0 0.0
    %223 = vmatmul.mubr.f32.gmra.mrb[0].mxu0 %v99
    %v224 = vpop.f32.mrb[0].mxu0
    %v225 = vadd.f32 %v151, %v224
    %v226 = vpop.f32.mrb[0].mxu0
    %227 = vmatprep.mubr.f32.mxu0 0.0
    %228 = vmatmul.mubr.f32.gmra.mrb[0].mxu0 %v100
    %v229 = vpop.f32.mrb[0].mxu0
    %v230 = vadd.f32 %v151, %v229
    %v231 = vpop.f32.mrb[0].mxu0
    %232 = vmatprep.mubr.f32.mxu0 0.0
    %233 = vmatmul.mubr.f32.gmra.mrb[0].mxu0 %v101
    %v234 = vpop.f32.mrb[0].mxu0
    %v235 = vadd.f32 %v151, %v234
    %v236 = vpop.f32.mrb[0].mxu0
    %237 = vmatprep.mubr.f32.mxu0 0.0
    %238 = vmatmul.mubr.f32.gmra.mrb[0].mxu0 %v102
    %v239 = vpop.f32.mrb[0].mxu0
    %v240 = vadd.f32 %v151, %v239
    %v241 = vpop.f32.mrb[0].mxu0
    %242 = vmatprep.mubr.f32.mxu0 0.0
    %243 = vmatmul.mubr.f32.gmra.mrb[0].mxu0 %v103
    %v244 = vpop.f32.mrb[0].mxu0
    %v245 = vadd.f32 %v151, %v244
    %v246 = vpop.f32.mrb[0].mxu0
    %247 = vmatprep.mubr.f32.mxu0 0.0
    %248 = vmatmul.mubr.f32.gmra.mrb[0].mxu0 %v104
    %v249 = vpop.f32.mrb[0].mxu0
    %v250 = vadd.f32 %v151, %v249
    %v251 = vpop.f32.mrb[0].mxu0
    %252 = vmatprep.mubr.f32.mxu0 0.0
    %253 = vmatmul.mubr.f32.gmra.mrb[0].mxu0 %v105
    %v254 = vpop.f32.mrb[0].mxu0
    %v255 = vadd.f32 %v151, %v254
    %v256 = vpop.f32.mrb[0].mxu0
    %257 = vmatprep.mubr.f32.mxu0 0.0
    %258 = vmatmul.mubr.f32.gmra.mrb[0].mxu0 %v106
    %v259 = vpop.f32.mrb[0].mxu0
    %v260 = vadd.f32 %v151, %v259
    %v261 = vpop.f32.mrb[0].mxu0
    %262 = vmatprep.mubr.f32.mxu0 0.0
    %263 = vmatmul.mubr.f32.gmra.mrb[0].mxu0 %v107
    %v264 = vpop.f32.mrb[0].mxu0
    %v265 = vadd.f32 %v151, %v264
    %v266 = vpop.f32.mrb[0].mxu0
    %267 = vmatprep.mubr.f32.mxu0 0.0
    %268 = vmatmul.mubr.f32.gmra.mrb[0].mxu0 %v108
    %v269 = vpop.f32.mrb[0].mxu0
    %v270 = vadd.f32 %v151, %v269
    %v271 = vpop.f32.mrb[0].mxu0
    %272 = vmatprep.mubr.f32.mxu0 0.0
    %273 = vmatmul.mubr.f32.gmra.mrb[0].mxu0 %v109
    %v274 = vpop.f32.mrb[0].mxu0
    %v275 = vadd.f32 %v151, %v274
    %v276 = vpop.f32.mrb[0].mxu0
    %277 = vmatprep.mubr.f32.mxu0 0.0
    %278 = vmatmul.mubr.f32.gmra.mrb[0].mxu0 %v110
    %v279 = vpop.f32.mrb[0].mxu0
    %v280 = vadd.f32 %v151, %v279
    %v281 = vpop.f32.mrb[0].mxu0
    %282 = vmatprep.mubr.f32.mxu0 0.0
    %283 = vmatmul.mubr.f32.gmra.mrb[0].mxu0 %v111
    %v284 = vpop.f32.mrb[0].mxu0
    %v285 = vadd.f32 %v151, %v284
    %v286 = vpop.f32.mrb[0].mxu0
    %287 = vmatprep.mubr.f32.mxu0 0.0
    %288 = vmatmul.mubr.f32.gmra.mrb[0].mxu0 %v112
    %v289 = vpop.f32.mrb[0].mxu0
    %v290 = vadd.f32 %v151, %v289
    %v291 = vpop.f32.mrb[0].mxu0
    %292 = vmatprep.mubr.f32.mxu0 0.0
    %293 = vmatmul.mubr.f32.gmra.mrb[0].mxu0 %v113
    %v294 = vpop.f32.mrb[0].mxu0
    %v295 = vadd.f32 %v151, %v294
    %v296 = vpop.f32.mrb[0].mxu0
    %297 = vdwg.mxu0
    %v298 = vmax.f32 %v220, 0.0
    %v299 = vmax.f32 %v225, 0.0
    %v300 = vmax.f32 %v230, 0.0
    %v301 = vmax.f32 %v235, 0.0
    %v302 = vmax.f32 %v240, 0.0
    %v303 = vmax.f32 %v245, 0.0
    %v304 = vmax.f32 %v250, 0.0
    %v305 = vmax.f32 %v255, 0.0
    %v306 = vmax.f32 %v260, 0.0
    %v307 = vmax.f32 %v265, 0.0
    %v308 = vmax.f32 %v270, 0.0
    %v309 = vmax.f32 %v275, 0.0
    %v310 = vmax.f32 %v280, 0.0
    %v311 = vmax.f32 %v285, 0.0
    %v312 = vmax.f32 %v290, 0.0
    %v313 = vmax.f32 %v295, 0.0
    %v314 = vpack.c.bf16 %v299, %v298
    %v315 = vpack.c.bf16 %v301, %v300
    %v316 = vpack.c.bf16 %v303, %v302
    %v317 = vpack.c.bf16 %v305, %v304
    %v318 = vpack.c.bf16 %v307, %v306
    %v319 = vpack.c.bf16 %v309, %v308
    %v320 = vpack.c.bf16 %v311, %v310
    %v321 = vpack.c.bf16 %v313, %v312
    %v330 = vunpack.c.l.b16 %v314
    %v331 = vunpack.c.h.b16 %v314
    %v332 = vunpack.c.l.b16 %v315
    %v333 = vunpack.c.h.b16 %v315
    %v334 = vunpack.c.l.b16 %v316
    %v335 = vunpack.c.h.b16 %v316
    %v336 = vunpack.c.l.b16 %v317
    %v337 = vunpack.c.h.b16 %v317
    %v338 = vunpack.c.l.b16 %v318
    %v339 = vunpack.c.h.b16 %v318
    %v340 = vunpack.c.l.b16 %v319
    %v341 = vunpack.c.h.b16 %v319
    %v342 = vunpack.c.l.b16 %v320
    %v343 = vunpack.c.h.b16 %v320
    %v344 = vunpack.c.l.b16 %v321
    %v345 = vunpack.c.h.b16 %v321
    %v346 = vpack.c.b16 %v330, %v330
    %v347 = vpack.c.b16 %v331, %v331
    %v348 = vpack.c.b16 %v332, %v332
    %v349 = vpack.c.b16 %v333, %v333
    %v350 = vpack.c.b16 %v334, %v334
    %v351 = vpack.c.b16 %v335, %v335
    %v352 = vpack.c.b16 %v336, %v336
    %v353 = vpack.c.b16 %v337, %v337
    %v354 = vpack.c.b16 %v338, %v338
    %v355 = vpack.c.b16 %v339, %v339
    %v356 = vpack.c.b16 %v340, %v340
    %v357 = vpack.c.b16 %v341, %v341
    %v358 = vpack.c.b16 %v342, %v342
    %v359 = vpack.c.b16 %v343, %v343
    %v360 = vpack.c.b16 %v344, %v344
    %v361 = vpack.c.b16 %v345, %v345
    %378 = vst [vmem:[#allocation8] sm:$0xf] %v346
    %379 = vst [vmem:[#allocation8 + $0x4] sm:$0xf] %v347
    %380 = vst [vmem:[#allocation8 + $0x8] sm:$0xf] %v348
    %381 = vst [vmem:[#allocation8 + $0xc] sm:$0xf] %v349
    %382 = vst [vmem:[#allocation8 + $0x10] sm:$0xf] %v350
    %383 = vst [vmem:[#allocation8 + $0x14] sm:$0xf] %v351
    %384 = vst [vmem:[#allocation8 + $0x18] sm:$0xf] %v352
    %385 = vst [vmem:[#allocation8 + $0x1c] sm:$0xf] %v353
    %386 = vst [vmem:[#allocation8 + $0x20] sm:$0xf] %v354
    %387 = vst [vmem:[#allocation8 + $0x24] sm:$0xf] %v355
    %388 = vst [vmem:[#allocation8 + $0x28] sm:$0xf] %v356
    %389 = vst [vmem:[#allocation8 + $0x2c] sm:$0xf] %v357
    %390 = vst [vmem:[#allocation8 + $0x30] sm:$0xf] %v358
    %391 = vst [vmem:[#allocation8 + $0x34] sm:$0xf] %v359
    %392 = vst [vmem:[#allocation8 + $0x38] sm:$0xf] %v360
    %393 = vst [vmem:[#allocation8 + $0x3c] sm:$0xf] %v361
    // Predicated region
    $region30: #{tpu_custom_call.1} parent=1 // pred_check
      _
    $region31: #{tpu_custom_call.1} parent=1 // pred_check_branch
      %395 = sbr.rel (0) target = $region33
    $region32: #{tpu_custom_call.1} parent=1 // pred_region
      %s397 = ssub.s32 2048, 2048
      %398 = vsyncadd [#allocation4], %s397
      %s399 = sshll.u32 [#allocation7], 4
      %s400 = int_to_ptr.vmem [resolvable:$true] %s399
      %405 = dma.vmem_to_hbm [thread:$0]  %s400, 2048, %s5, [#allocation4], 128, 128, 8
    $region33: #{tpu_custom_call.1} parent=1 // pred_fallthru
      _
    // Predicated region
    $region34: #{tpu_custom_call.1} parent=1 // pred_check
      _
    $region35: #{tpu_custom_call.1} parent=1 // pred_check_branch
      %407 = sbr.rel (0) target = $region37
    $region36: #{tpu_custom_call.1} parent=1 // pred_region
      %s409 = ssub.s32 1024, 1024
      %410 = vsyncadd [#allocation9], %s409
      %s411 = sshll.u32 [#allocation8], 4
      %s412 = int_to_ptr.vmem [resolvable:$true] %s411
      %417 = dma.vmem_to_hbm [thread:$0]  %s412, 1024, %s6, [#allocation9], 64, 64, 4
    $region37: #{tpu_custom_call.1} parent=1 // pred_fallthru
      _
    // Predicated region
    $region38: #{tpu_custom_call.1} parent=1 // pred_check
      _
    $region39: #{tpu_custom_call.1} parent=1 // pred_check_branch
      %419 = sbr.rel (0) target = $region41
    $region40: #{tpu_custom_call.1} parent=1 // pred_region
      %420 = dma.done [#allocation4], 2048
    $region41: #{tpu_custom_call.1} parent=1 // pred_fallthru
      _
    // Predicated region
    $region42: #{tpu_custom_call.1} parent=1 // pred_check
      _
    $region43: #{tpu_custom_call.1} parent=1 // pred_check_branch
      %422 = sbr.rel (0) target = $region45
    $region44: #{tpu_custom_call.1} parent=1 // pred_region
      %423 = dma.done [#allocation9], 1024
    $region45: #{tpu_custom_call.1} parent=1 // pred_fallthru
      _
    %424 = vsyncpa [#allocation3], 1
    %425 = vsyncpa [#allocation6], 1
    %426 = vsyncpa [#allocation4], 1
    %427 = vsyncpa [#allocation9], 1

</llo_original>
